<compile_context>
chip_gen: v5e
topology: v5e:2x2
jax: 0.10.0
libtpu: 0.0.40
codegen_flags: <defaults>
</compile_context>

<pallas_src>
import jax
import jax.numpy as jnp
from jax.experimental import pallas as pl
from jax.experimental.pallas import tpu as pltpu

EPS = 1e-5


def _round_up(x, m):
    return ((x + m - 1) // m) * m


def _critic_kernel(
    obs_ref, act_ref, wt_ref,
    bt_ref, g_ref, be_ref,
    w1h_ref, w1a_ref, b1_ref,
    q1_w2_ref, q1_b2_ref, q2_w2_ref, q2_b2_ref,
    w3_ref, b3_ref,
    q_ref,
    t_acc,
):
    k = pl.program_id(1)

    # ---- K-tiled trunk matmul: accumulate pre-activation in f32 scratch ----
    @pl.when(k == 0)
    def _():
        t_acc[...] = jnp.zeros_like(t_acc)

    t_acc[...] += jnp.dot(obs_ref[...], wt_ref[...],
                          preferred_element_type=jnp.float32)

    # ---- epilogue on the last K step: LayerNorm + Tanh + both Q heads ----
    @pl.when(k == pl.num_programs(1) - 1)
    def _():
        t = t_acc[...] + bt_ref[...]
        # Two-pass LN statistics (PyTorch-parity; avoids E[x^2]-E[x]^2 cancellation).
        mu = jnp.mean(t, axis=-1, keepdims=True)
        c = t - mu
        var = jnp.mean(c * c, axis=-1, keepdims=True)
        h = jnp.tanh(c * jax.lax.rsqrt(var + EPS) * g_ref[...] + be_ref[...])

        # Fused layer 1 of both Q heads: concat([h, act]) @ [W1_q1 | W1_q2].
        a = (jnp.dot(h.astype(w1h_ref.dtype), w1h_ref[...],
                     preferred_element_type=jnp.float32)
             + jnp.dot(act_ref[...].astype(w1a_ref.dtype), w1a_ref[...],
                       preferred_element_type=jnp.float32)
             + b1_ref[...])
        a = jnp.maximum(a, 0.0)
        hid = q1_w2_ref.shape[0]
        a1 = a[:, :hid]      # free views when hid % 128 == 0 (production hid=1024)
        a2 = a[:, hid:]

        # ---- layer 2 (per head), f32 accumulate / ReLU ----
        z1 = jnp.maximum(
            jnp.dot(a1.astype(q1_w2_ref.dtype), q1_w2_ref[...],
                    preferred_element_type=jnp.float32) + q1_b2_ref[...], 0.0)
        z2 = jnp.maximum(
            jnp.dot(a2.astype(q2_w2_ref.dtype), q2_w2_ref[...],
                    preferred_element_type=jnp.float32) + q2_b2_ref[...], 0.0)

        # ---- layer 3: N=1 projections on the VPU/XLU (MXU pass would be wasted),
        # packed into a single lane-dense (block_b, 2) store ----
        w3 = w3_ref[...]                       # (2, hidden): row 0 -> Q1, row 1 -> Q2
        q1 = jnp.sum(z1 * w3[0:1, :], axis=-1, keepdims=True)
        q2 = jnp.sum(z2 * w3[1:2, :], axis=-1, keepdims=True)
        q_ref[...] = jnp.concatenate([q1, q2], axis=-1) + b3_ref[...]


def critic_forward(obs, action, params, *, block_b=None, block_k=2048,
                   use_bf16=True, vmem_limit_bytes=48 * 1024 * 1024):
    """obs: (B, repr_dim), action: (B, action_dim) -> (q1, q2), each (B, 1).

    block_b:  batch tile (default 256; use 128 on v5e).
    block_k:  repr_dim reduction tile (rounded to a multiple of 128 when tiling).
    """
    B, repr_dim = obs.shape
    act_dim = action.shape[1]
    feat = params["wt"].shape[1]
    hid = params["q1_w2"].shape[0]

    # ---- batch tiling (multiple of 8 sublanes) ----
    if block_b is None:
        block_b = 256
    block_b = min(block_b, _round_up(B, 8))
    block_b = max(8, _round_up(block_b, 8))
    if B >= 16:
        # v7x megacore: keep >= 2 batch tiles so both TensorCores get work.
        block_b = min(block_b, _round_up((B + 1) // 2, 8))
    B_pad = _round_up(B, block_b)

    # ---- repr_dim (K) tiling ----
    if repr_dim <= block_k:
        tk = repr_dim                      # single K step, no padding needed
        K_pad = repr_dim
    else:
        tk = _round_up(block_k, 128)       # lane-aligned K tile
        K_pad = _round_up(repr_dim, tk)    # zero-pad: contributes 0 to the matmul

    pad_b = B_pad - B
    pad_k = K_pad - repr_dim
    if pad_b or pad_k:
        obs = jnp.pad(obs, ((0, pad_b), (0, pad_k)))
    if pad_b:
        action = jnp.pad(action, ((0, pad_b), (0, 0)))

    wt = params["wt"]
    if pad_k:
        wt = jnp.pad(wt, ((0, pad_k), (0, 0)))

    # ---- fuse the two heads' layer-1 and layer-3 parameters ----
    w1h = jnp.concatenate([params["q1_w1h"], params["q2_w1h"]], axis=1)   # (feat, 2H)
    w1a = jnp.concatenate([params["q1_w1a"], params["q2_w1a"]], axis=1)   # (act, 2H)
    b1 = jnp.concatenate([params["q1_b1"], params["q2_b1"]], axis=1)      # (1, 2H)
    w3 = jnp.concatenate([params["q1_w3"].T, params["q2_w3"].T], axis=0)  # (2, H)
    b3 = jnp.concatenate([params["q1_b3"], params["q2_b3"]], axis=1)      # (1, 2)

    q1_w2, q2_w2 = params["q1_w2"], params["q2_w2"]
    if use_bf16:
        # bf16 matmul operands: halves HBM traffic + resident-weight VMEM and
        # doubles MXU rate; accumulation / elementwise stay f32.
        cast = lambda x: x.astype(jnp.bfloat16)
        obs, wt = cast(obs), cast(wt)
        w1h, w1a = cast(w1h), cast(w1a)
        q1_w2, q2_w2 = cast(q1_w2), cast(q2_w2)

    resident = (params["bt"], params["ln_g"], params["ln_b"],
                w1h, w1a, b1,
                q1_w2, params["q1_b2"], q2_w2, params["q2_b2"],
                w3, b3)

    grid = (B_pad // block_b, K_pad // tk)

    def resident_spec(arr):
        # Constant block index -> stays VMEM-resident; single buffer (no point
        # double-buffering a block that never changes).
        return pl.BlockSpec(arr.shape, lambda i, k: (0,) * arr.ndim,
                            pipeline_mode=pl.Buffered(1))

    in_specs = (
        [pl.BlockSpec((block_b, tk), lambda i, k: (i, k)),        # obs stream
         pl.BlockSpec((block_b, act_dim), lambda i, k: (i, 0)),   # action per batch tile
         pl.BlockSpec((tk, feat), lambda i, k: (k, 0))]           # trunk weight stream
        + [resident_spec(w) for w in resident])
    out_specs = pl.BlockSpec((block_b, 2), lambda i, k: (i, 0))

    n_b_tiles = B_pad // block_b
    flops = (2 * B_pad * K_pad * feat                  # trunk matmul
             + 2 * B_pad * (feat + act_dim) * 2 * hid  # fused layer 1 (both heads)
             + 2 * 2 * B_pad * hid * hid               # layer 2 (both heads)
             + 2 * 2 * B_pad * hid)                    # layer 3 (both heads)
    bytes_accessed = (obs.size * obs.dtype.itemsize
                      + action.size * action.dtype.itemsize
                      + n_b_tiles * wt.size * wt.dtype.itemsize   # re-streamed per batch tile
                      + sum(w.size * w.dtype.itemsize for w in resident)
                      + B_pad * 2 * 4)
    cost = pl.CostEstimate(flops=int(flops),
                           transcendentals=int(B_pad * (feat + 1)),
                           bytes_accessed=int(bytes_accessed))

    compiler_params = pltpu.CompilerParams(
        dimension_semantics=("parallel", "arbitrary"),
        vmem_limit_bytes=vmem_limit_bytes,
    )

    q_pair = pl.pallas_call(
        _critic_kernel,
        out_shape=jax.ShapeDtypeStruct((B_pad, 2), jnp.float32),
        grid_spec=pltpu.PrefetchScalarGridSpec(
            num_scalar_prefetch=0,
            grid=grid,
            in_specs=in_specs,
            out_specs=out_specs,
            scratch_shapes=[pltpu.VMEM((block_b, feat), jnp.float32)],
        ),
        compiler_params=compiler_params,
        cost_estimate=cost,
    )(obs, action, wt, *resident)

    return q_pair[:B, 0:1], q_pair[:B, 1:2]


def init_params(key, repr_dim, action_dim, feature_dim, hidden_dim):
    """Deterministic orthogonal weights / zero biases (mirrors orthogonal_init)."""
    ortho = jax.nn.initializers.orthogonal()
    ks = jax.random.split(key, 8)
    f32 = jnp.float32
    params = {
        "wt": ortho(ks[0], (repr_dim, feature_dim), f32),
        "bt": jnp.zeros((1, feature_dim), f32),
        "ln_g": jnp.ones((1, feature_dim), f32),
        "ln_b": jnp.zeros((1, feature_dim), f32),
    }
    # Q heads: first-layer weight split into (feature part, action part), which
    # reproduces concat([h, action]) @ W1 exactly.
    for name, k0, k1, k2 in (("q1", ks[1], ks[2], ks[3]),
                             ("q2", ks[4], ks[5], ks[6])):
        w1 = ortho(k0, (feature_dim + action_dim, hidden_dim), f32)
        params[f"{name}_w1h"] = w1[:feature_dim]
        params[f"{name}_w1a"] = w1[feature_dim:]
        params[f"{name}_b1"] = jnp.zeros((1, hidden_dim), f32)
        params[f"{name}_w2"] = ortho(k1, (hidden_dim, hidden_dim), f32)
        params[f"{name}_b2"] = jnp.zeros((1, hidden_dim), f32)
        params[f"{name}_w3"] = ortho(k2, (hidden_dim, 1), f32)
        params[f"{name}_b3"] = jnp.zeros((1, 1), f32)
    return params


def critic_reference(obs, action, params):
    """Pure-JAX reference for correctness checks."""
    t = obs @ params["wt"] + params["bt"]
    mu = jnp.mean(t, -1, keepdims=True)
    var = jnp.mean((t - mu) ** 2, -1, keepdims=True)
    h = jnp.tanh((t - mu) / jnp.sqrt(var + EPS) * params["ln_g"] + params["ln_b"])

    def head(p):
        z = jnp.maximum(h @ params[p + "_w1h"] + action @ params[p + "_w1a"]
                        + params[p + "_b1"], 0.0)
        z = jnp.maximum(z @ params[p + "_w2"] + params[p + "_b2"], 0.0)
        return z @ params[p + "_w3"] + params[p + "_b3"]

    return head("q1"), head("q2")


if __name__ == "__main__":
    key = jax.random.PRNGKey(0)
    k_obs, k_act, k_param = jax.random.split(key, 3)

    batch, repr_dim, action_dim, feature_dim, hidden_dim = 8, 256, 4, 32, 32
    obs = jax.random.normal(k_obs, (batch, repr_dim), jnp.float32)
    action = jax.random.uniform(k_act, (batch, action_dim), jnp.float32,
                                minval=-1.0, maxval=1.0)
    params = init_params(k_param, repr_dim, action_dim, feature_dim, hidden_dim)

    q1_ref, q2_ref = critic_reference(obs, action, params)

    # f32, single K step
    q1, q2 = critic_forward(obs, action, params, use_bf16=False)
    jax.block_until_ready((q1, q2))
    assert q1.shape == (batch, 1) and q2.shape == (batch, 1)
    assert jnp.allclose(q1, q1_ref, atol=1e-4, rtol=1e-4)
    assert jnp.allclose(q2, q2_ref, atol=1e-4, rtol=1e-4)

    # f32, K-tiled trunk (block_k=128 -> 2 reduction steps over the f32 accumulator)
    q1k, q2k = critic_forward(obs, action, params, use_bf16=False, block_k=128)
    jax.block_until_ready((q1k, q2k))
    assert jnp.allclose(q1k, q1_ref, atol=1e-4, rtol=1e-4)
    assert jnp.allclose(q2k, q2_ref, atol=1e-4, rtol=1e-4)

    # default bf16 matmul operands (f32 accumulate / elementwise), K-tiled
    q1b, q2b = critic_forward(obs, action, params, block_k=128)
    jax.block_until_ready((q1b, q2b))
    assert jnp.allclose(q1b, q1_ref, atol=5e-2, rtol=5e-2)
    assert jnp.allclose(q2b, q2_ref, atol=5e-2, rtol=5e-2)

    # ragged batch: exercises the pad-to-tile remainder handling
    q1r, q2r = critic_forward(obs[:5], action[:5], params, use_bf16=False, block_b=8)
    jax.block_until_ready((q1r, q2r))
    assert q1r.shape == (5, 1) and q2r.shape == (5, 1)
    assert jnp.allclose(q1r, q1_ref[:5], atol=1e-4, rtol=1e-4)
    assert jnp.allclose(q2r, q2_ref[:5], atol=1e-4, rtol=1e-4)

    print("KERNEL_OK")
</pallas_src>

<mosaic_0001>
module attributes {stable_mosaic.version = 11 : i64} {
  func.func @_critic_kernel(%arg0: i32, %arg1: i32, %arg2: memref<8x256xf32, #tpu.memory_space<vmem>>, %arg3: memref<8x4xf32, #tpu.memory_space<vmem>>, %arg4: memref<256x32xf32, #tpu.memory_space<vmem>>, %arg5: memref<1x32xf32, #tpu.memory_space<vmem>>, %arg6: memref<1x32xf32, #tpu.memory_space<vmem>>, %arg7: memref<1x32xf32, #tpu.memory_space<vmem>>, %arg8: memref<32x64xf32, #tpu.memory_space<vmem>>, %arg9: memref<4x64xf32, #tpu.memory_space<vmem>>, %arg10: memref<1x64xf32, #tpu.memory_space<vmem>>, %arg11: memref<32x32xf32, #tpu.memory_space<vmem>>, %arg12: memref<1x32xf32, #tpu.memory_space<vmem>>, %arg13: memref<32x32xf32, #tpu.memory_space<vmem>>, %arg14: memref<1x32xf32, #tpu.memory_space<vmem>>, %arg15: memref<2x32xf32, #tpu.memory_space<vmem>>, %arg16: memref<1x2xf32, #tpu.memory_space<vmem>>, %arg17: memref<8x2xf32, #tpu.memory_space<vmem>>, %arg18: memref<8x32xf32, #tpu.memory_space<vmem>>) attributes {dimension_semantics = [#tpu.dimension_semantics<parallel>, #tpu.dimension_semantics<arbitrary>], iteration_bounds = array<i64: 1, 1>, scalar_prefetch = 0 : i64, scratch_operands = 1 : i64, tpu.core_type = #tpu.core_type<tc>, window_params = [{transform_indices = @transform_0, window_bounds = array<i64: 8, 256>}, {transform_indices = @transform_1, window_bounds = array<i64: 8, 4>}, {transform_indices = @transform_2, window_bounds = array<i64: 256, 32>}, {pipeline_mode = #tpu.pipeline_mode<synchronous>, transform_indices = @transform_3, window_bounds = array<i64: 1, 32>}, {pipeline_mode = #tpu.pipeline_mode<synchronous>, transform_indices = @transform_4, window_bounds = array<i64: 1, 32>}, {pipeline_mode = #tpu.pipeline_mode<synchronous>, transform_indices = @transform_5, window_bounds = array<i64: 1, 32>}, {pipeline_mode = #tpu.pipeline_mode<synchronous>, transform_indices = @transform_6, window_bounds = array<i64: 32, 64>}, {pipeline_mode = #tpu.pipeline_mode<synchronous>, transform_indices = @transform_7, window_bounds = array<i64: 4, 64>}, {pipeline_mode = #tpu.pipeline_mode<synchronous>, transform_indices = @transform_8, window_bounds = array<i64: 1, 64>}, {pipeline_mode = #tpu.pipeline_mode<synchronous>, transform_indices = @transform_9, window_bounds = array<i64: 32, 32>}, {pipeline_mode = #tpu.pipeline_mode<synchronous>, transform_indices = @transform_10, window_bounds = array<i64: 1, 32>}, {pipeline_mode = #tpu.pipeline_mode<synchronous>, transform_indices = @transform_11, window_bounds = array<i64: 32, 32>}, {pipeline_mode = #tpu.pipeline_mode<synchronous>, transform_indices = @transform_12, window_bounds = array<i64: 1, 32>}, {pipeline_mode = #tpu.pipeline_mode<synchronous>, transform_indices = @transform_13, window_bounds = array<i64: 2, 32>}, {pipeline_mode = #tpu.pipeline_mode<synchronous>, transform_indices = @transform_14, window_bounds = array<i64: 1, 2>}, {transform_indices = @transform_15, window_bounds = array<i64: 8, 2>}]} {
    %c0_i32 = arith.constant 0 : i32
    %0 = arith.cmpi eq, %arg1, %c0_i32 : i32
    %1 = arith.extui %0 : i1 to i32
    %c0_i32_0 = arith.constant 0 : i32
    %2 = arith.cmpi ne, %1, %c0_i32_0 : i32
    scf.if %2 {
      %cst_10 = arith.constant 0.000000e+00 : f32
      %12 = vector.broadcast %cst_10 : f32 to vector<8x32xf32>
      %c0_11 = arith.constant 0 : index
      %c0_12 = arith.constant 0 : index
      %13 = vector.load %arg18[%c0_11, %c0_12] : memref<8x32xf32, #tpu.memory_space<vmem>>, vector<8x32xf32>
      tpu.vector_store %arg18[%c0_11, %c0_12], %12 {strides = array<i32>} : memref<8x32xf32, #tpu.memory_space<vmem>>, vector<8x32xf32>,
    } else {
    }
    %c0 = arith.constant 0 : index
    %c0_1 = arith.constant 0 : index
    %3 = vector.load %arg18[%c0, %c0_1] : memref<8x32xf32, #tpu.memory_space<vmem>>, vector<8x32xf32>
    %c0_2 = arith.constant 0 : index
    %c0_3 = arith.constant 0 : index
    %4 = vector.load %arg2[%c0_2, %c0_3] : memref<8x256xf32, #tpu.memory_space<vmem>>, vector<8x256xf32>
    %c0_4 = arith.constant 0 : index
    %c0_5 = arith.constant 0 : index
    %5 = vector.load %arg4[%c0_4, %c0_5] : memref<256x32xf32, #tpu.memory_space<vmem>>, vector<256x32xf32>
    %cst = arith.constant dense<0.000000e+00> : vector<8x32xf32>
    %6 = tpu.matmul %4, %5, %cst {dimension_numbers = #tpu.dot_dimension_numbers<[1], [0], [0], [1], [0, 0, 1, 1], [], []>} : vector<8x256xf32>, vector<256x32xf32>, vector<8x32xf32> -> vector<8x32xf32>
    %7 = arith.addf %3, %6 : vector<8x32xf32>
    %c0_6 = arith.constant 0 : index
    %c0_7 = arith.constant 0 : index
    %8 = vector.load %arg18[%c0_6, %c0_7] : memref<8x32xf32, #tpu.memory_space<vmem>>, vector<8x32xf32>
    tpu.vector_store %arg18[%c0_6, %c0_7], %7 {strides = array<i32>} : memref<8x32xf32, #tpu.memory_space<vmem>>, vector<8x32xf32>,
    %c0_i32_8 = arith.constant 0 : i32
    %9 = arith.cmpi eq, %arg1, %c0_i32_8 : i32
    %10 = arith.extui %9 : i1 to i32
    %c0_i32_9 = arith.constant 0 : i32
    %11 = arith.cmpi ne, %10, %c0_i32_9 : i32
    scf.if %11 {
      %c0_10 = arith.constant 0 : index
      %c0_11 = arith.constant 0 : index
      %12 = vector.load %arg18[%c0_10, %c0_11] : memref<8x32xf32, #tpu.memory_space<vmem>>, vector<8x32xf32>
      %c0_12 = arith.constant 0 : index
      %c0_13 = arith.constant 0 : index
      %13 = vector.load %arg5[%c0_12, %c0_13] : memref<1x32xf32, #tpu.memory_space<vmem>>, vector<1x32xf32>
      %14 = vector.broadcast %13 : vector<1x32xf32> to vector<8x32xf32>
      %15 = arith.addf %12, %14 : vector<8x32xf32>
      %cst_14 = arith.constant dense<0.000000e+00> : vector<8xf32>
      %16 = vector.multi_reduction <add>, %15, %cst_14 [1] : vector<8x32xf32> to vector<8xf32>
      %17 = vector.shape_cast %16 : vector<8xf32> to vector<8x1xf32>
      %cst_15 = arith.constant 3.200000e+01 : f32
      %18 = vector.broadcast %cst_15 : f32 to vector<8x1xf32>
      %19 = arith.divf %17, %18 : vector<8x1xf32>
      %20 = vector.broadcast %19 : vector<8x1xf32> to vector<8x32xf32>
      %21 = arith.subf %15, %20 : vector<8x32xf32>
      %22 = arith.mulf %21, %21 : vector<8x32xf32>
      %cst_16 = arith.constant dense<0.000000e+00> : vector<8xf32>
      %23 = vector.multi_reduction <add>, %22, %cst_16 [1] : vector<8x32xf32> to vector<8xf32>
      %24 = vector.shape_cast %23 : vector<8xf32> to vector<8x1xf32>
      %cst_17 = arith.constant 3.200000e+01 : f32
      %25 = vector.broadcast %cst_17 : f32 to vector<8x1xf32>
      %26 = arith.divf %24, %25 : vector<8x1xf32>
      %cst_18 = arith.constant 9.99999974E-6 : f32
      %27 = vector.broadcast %cst_18 : f32 to vector<8x1xf32>
      %28 = arith.addf %26, %27 : vector<8x1xf32>
      %29 = math.rsqrt %28 : vector<8x1xf32>
      %30 = vector.broadcast %29 : vector<8x1xf32> to vector<8x32xf32>
      %31 = arith.mulf %21, %30 : vector<8x32xf32>
      %c0_19 = arith.constant 0 : index
      %c0_20 = arith.constant 0 : index
      %32 = vector.load %arg6[%c0_19, %c0_20] : memref<1x32xf32, #tpu.memory_space<vmem>>, vector<1x32xf32>
      %33 = vector.broadcast %32 : vector<1x32xf32> to vector<8x32xf32>
      %34 = arith.mulf %31, %33 : vector<8x32xf32>
      %c0_21 = arith.constant 0 : index
      %c0_22 = arith.constant 0 : index
      %35 = vector.load %arg7[%c0_21, %c0_22] : memref<1x32xf32, #tpu.memory_space<vmem>>, vector<1x32xf32>
      %36 = vector.broadcast %35 : vector<1x32xf32> to vector<8x32xf32>
      %37 = arith.addf %34, %36 : vector<8x32xf32>
      %38 = math.tanh %37 : vector<8x32xf32>
      %c0_23 = arith.constant 0 : index
      %c0_24 = arith.constant 0 : index
      %39 = vector.load %arg8[%c0_23, %c0_24] : memref<32x64xf32, #tpu.memory_space<vmem>>, vector<32x64xf32>
      %cst_25 = arith.constant dense<0.000000e+00> : vector<8x64xf32>
      %40 = tpu.matmul %38, %39, %cst_25 {dimension_numbers = #tpu.dot_dimension_numbers<[1], [0], [0], [1], [0, 0, 1, 1], [], []>} : vector<8x32xf32>, vector<32x64xf32>, vector<8x64xf32> -> vector<8x64xf32>
      %c0_26 = arith.constant 0 : index
      %c0_27 = arith.constant 0 : index
      %41 = vector.load %arg3[%c0_26, %c0_27] : memref<8x4xf32, #tpu.memory_space<vmem>>, vector<8x4xf32>
      %c0_28 = arith.constant 0 : index
      %c0_29 = arith.constant 0 : index
      %42 = vector.load %arg9[%c0_28, %c0_29] : memref<4x64xf32, #tpu.memory_space<vmem>>, vector<4x64xf32>
      %cst_30 = arith.constant dense<0.000000e+00> : vector<8x64xf32>
      %43 = tpu.matmul %41, %42, %cst_30 {dimension_numbers = #tpu.dot_dimension_numbers<[1], [0], [0], [1], [0, 0, 1, 1], [], []>} : vector<8x4xf32>, vector<4x64xf32>, vector<8x64xf32> -> vector<8x64xf32>
      %44 = arith.addf %40, %43 : vector<8x64xf32>
      %c0_31 = arith.constant 0 : index
      %c0_32 = arith.constant 0 : index
      %45 = vector.load %arg10[%c0_31, %c0_32] : memref<1x64xf32, #tpu.memory_space<vmem>>, vector<1x64xf32>
      %46 = vector.broadcast %45 : vector<1x64xf32> to vector<8x64xf32>
      %47 = arith.addf %44, %46 : vector<8x64xf32>
      %cst_33 = arith.constant 0.000000e+00 : f32
      %48 = vector.broadcast %cst_33 : f32 to vector<8x64xf32>
      %49 = arith.maximumf %47, %48 : vector<8x64xf32>
      %50 = vector.extract_strided_slice %49 {offsets = [0, 0], sizes = [8, 32], strides = [1, 1]} : vector<8x64xf32> to vector<8x32xf32>
      %51 = vector.extract_strided_slice %49 {offsets = [0, 32], sizes = [8, 32], strides = [1, 1]} : vector<8x64xf32> to vector<8x32xf32>
      %c0_34 = arith.constant 0 : index
      %c0_35 = arith.constant 0 : index
      %52 = vector.load %arg11[%c0_34, %c0_35] : memref<32x32xf32, #tpu.memory_space<vmem>>, vector<32x32xf32>
      %cst_36 = arith.constant dense<0.000000e+00> : vector<8x32xf32>
      %53 = tpu.matmul %50, %52, %cst_36 {dimension_numbers = #tpu.dot_dimension_numbers<[1], [0], [0], [1], [0, 0, 1, 1], [], []>} : vector<8x32xf32>, vector<32x32xf32>, vector<8x32xf32> -> vector<8x32xf32>
      %c0_37 = arith.constant 0 : index
      %c0_38 = arith.constant 0 : index
      %54 = vector.load %arg12[%c0_37, %c0_38] : memref<1x32xf32, #tpu.memory_space<vmem>>, vector<1x32xf32>
      %55 = vector.broadcast %54 : vector<1x32xf32> to vector<8x32xf32>
      %56 = arith.addf %53, %55 : vector<8x32xf32>
      %cst_39 = arith.constant 0.000000e+00 : f32
      %57 = vector.broadcast %cst_39 : f32 to vector<8x32xf32>
      %58 = arith.maximumf %56, %57 : vector<8x32xf32>
      %c0_40 = arith.constant 0 : index
      %c0_41 = arith.constant 0 : index
      %59 = vector.load %arg13[%c0_40, %c0_41] : memref<32x32xf32, #tpu.memory_space<vmem>>, vector<32x32xf32>
      %cst_42 = arith.constant dense<0.000000e+00> : vector<8x32xf32>
      %60 = tpu.matmul %51, %59, %cst_42 {dimension_numbers = #tpu.dot_dimension_numbers<[1], [0], [0], [1], [0, 0, 1, 1], [], []>} : vector<8x32xf32>, vector<32x32xf32>, vector<8x32xf32> -> vector<8x32xf32>
      %c0_43 = arith.constant 0 : index
      %c0_44 = arith.constant 0 : index
      %61 = vector.load %arg14[%c0_43, %c0_44] : memref<1x32xf32, #tpu.memory_space<vmem>>, vector<1x32xf32>
      %62 = vector.broadcast %61 : vector<1x32xf32> to vector<8x32xf32>
      %63 = arith.addf %60, %62 : vector<8x32xf32>
      %cst_45 = arith.constant 0.000000e+00 : f32
      %64 = vector.broadcast %cst_45 : f32 to vector<8x32xf32>
      %65 = arith.maximumf %63, %64 : vector<8x32xf32>
      %c0_46 = arith.constant 0 : index
      %c0_47 = arith.constant 0 : index
      %66 = vector.load %arg15[%c0_46, %c0_47] : memref<2x32xf32, #tpu.memory_space<vmem>>, vector<2x32xf32>
      %67 = vector.extract_strided_slice %66 {offsets = [0, 0], sizes = [1, 32], strides = [1, 1]} : vector<2x32xf32> to vector<1x32xf32>
      %68 = vector.broadcast %67 : vector<1x32xf32> to vector<8x32xf32>
      %69 = arith.mulf %58, %68 : vector<8x32xf32>
      %cst_48 = arith.constant dense<0.000000e+00> : vector<8xf32>
      %70 = vector.multi_reduction <add>, %69, %cst_48 [1] : vector<8x32xf32> to vector<8xf32>
      %71 = vector.shape_cast %70 : vector<8xf32> to vector<8x1xf32>
      %72 = vector.extract_strided_slice %66 {offsets = [1, 0], sizes = [1, 32], strides = [1, 1]} : vector<2x32xf32> to vector<1x32xf32>
      %73 = vector.broadcast %72 : vector<1x32xf32> to vector<8x32xf32>
      %74 = arith.mulf %65, %73 : vector<8x32xf32>
      %cst_49 = arith.constant dense<0.000000e+00> : vector<8xf32>
      %75 = vector.multi_reduction <add>, %74, %cst_49 [1] : vector<8x32xf32> to vector<8xf32>
      %76 = vector.shape_cast %75 : vector<8xf32> to vector<8x1xf32>
      %77 = tpu.concatenate %71, %76 in 1 : vector<8x1xf32>, vector<8x1xf32> -> vector<8x2xf32>
      %c0_50 = arith.constant 0 : index
      %c0_51 = arith.constant 0 : index
      %78 = vector.load %arg16[%c0_50, %c0_51] : memref<1x2xf32, #tpu.memory_space<vmem>>, vector<1x2xf32>
      %79 = vector.broadcast %78 : vector<1x2xf32> to vector<8x2xf32>
      %80 = arith.addf %77, %79 : vector<8x2xf32>
      %c0_52 = arith.constant 0 : index
      %c0_53 = arith.constant 0 : index
      %81 = vector.load %arg17[%c0_52, %c0_53] : memref<8x2xf32, #tpu.memory_space<vmem>>, vector<8x2xf32>
      tpu.vector_store %arg17[%c0_52, %c0_53], %80 {strides = array<i32>} : memref<8x2xf32, #tpu.memory_space<vmem>>, vector<8x2xf32>,
    } else {
    }
    return
  }
  func.func @transform_0(%arg0: i32, %arg1: i32) -> (i32, i32) {
    %c0_i32 = arith.constant 0 : i32
    return %arg0, %arg1 : i32, i32
  }
  func.func @transform_1(%arg0: i32, %arg1: i32) -> (i32, i32) {
    %c0_i32 = arith.constant 0 : i32
    %c0_i32_0 = arith.constant 0 : i32
    return %arg0, %c0_i32 : i32, i32
  }
  func.func @transform_2(%arg0: i32, %arg1: i32) -> (i32, i32) {
    %c0_i32 = arith.constant 0 : i32
    %c0_i32_0 = arith.constant 0 : i32
    return %arg1, %c0_i32 : i32, i32
  }
  func.func @transform_3(%arg0: i32, %arg1: i32) -> (i32, i32) {
    %c0_i32 = arith.constant 0 : i32
    %c0_i32_0 = arith.constant 0 : i32
    %c0_i32_1 = arith.constant 0 : i32
    return %c0_i32, %c0_i32_0 : i32, i32
  }
  func.func @transform_4(%arg0: i32, %arg1: i32) -> (i32, i32) {
    %c0_i32 = arith.constant 0 : i32
    %c0_i32_0 = arith.constant 0 : i32
    %c0_i32_1 = arith.constant 0 : i32
    return %c0_i32, %c0_i32_0 : i32, i32
  }
  func.func @transform_5(%arg0: i32, %arg1: i32) -> (i32, i32) {
    %c0_i32 = arith.constant 0 : i32
    %c0_i32_0 = arith.constant 0 : i32
    %c0_i32_1 = arith.constant 0 : i32
    return %c0_i32, %c0_i32_0 : i32, i32
  }
  func.func @transform_6(%arg0: i32, %arg1: i32) -> (i32, i32) {
    %c0_i32 = arith.constant 0 : i32
    %c0_i32_0 = arith.constant 0 : i32
    %c0_i32_1 = arith.constant 0 : i32
    return %c0_i32, %c0_i32_0 : i32, i32
  }
  func.func @transform_7(%arg0: i32, %arg1: i32) -> (i32, i32) {
    %c0_i32 = arith.constant 0 : i32
    %c0_i32_0 = arith.constant 0 : i32
    %c0_i32_1 = arith.constant 0 : i32
    return %c0_i32, %c0_i32_0 : i32, i32
  }
  func.func @transform_8(%arg0: i32, %arg1: i32) -> (i32, i32) {
    %c0_i32 = arith.constant 0 : i32
    %c0_i32_0 = arith.constant 0 : i32
    %c0_i32_1 = arith.constant 0 : i32
    return %c0_i32, %c0_i32_0 : i32, i32
  }
  func.func @transform_9(%arg0: i32, %arg1: i32) -> (i32, i32) {
    %c0_i32 = arith.constant 0 : i32
    %c0_i32_0 = arith.constant 0 : i32
    %c0_i32_1 = arith.constant 0 : i32
    return %c0_i32, %c0_i32_0 : i32, i32
  }
  func.func @transform_10(%arg0: i32, %arg1: i32) -> (i32, i32) {
    %c0_i32 = arith.constant 0 : i32
    %c0_i32_0 = arith.constant 0 : i32
    %c0_i32_1 = arith.constant 0 : i32
    return %c0_i32, %c0_i32_0 : i32, i32
  }
  func.func @transform_11(%arg0: i32, %arg1: i32) -> (i32, i32) {
    %c0_i32 = arith.constant 0 : i32
    %c0_i32_0 = arith.constant 0 : i32
    %c0_i32_1 = arith.constant 0 : i32
    return %c0_i32, %c0_i32_0 : i32, i32
  }
  func.func @transform_12(%arg0: i32, %arg1: i32) -> (i32, i32) {
    %c0_i32 = arith.constant 0 : i32
    %c0_i32_0 = arith.constant 0 : i32
    %c0_i32_1 = arith.constant 0 : i32
    return %c0_i32, %c0_i32_0 : i32, i32
  }
  func.func @transform_13(%arg0: i32, %arg1: i32) -> (i32, i32) {
    %c0_i32 = arith.constant 0 : i32
    %c0_i32_0 = arith.constant 0 : i32
    %c0_i32_1 = arith.constant 0 : i32
    return %c0_i32, %c0_i32_0 : i32, i32
  }
  func.func @transform_14(%arg0: i32, %arg1: i32) -> (i32, i32) {
    %c0_i32 = arith.constant 0 : i32
    %c0_i32_0 = arith.constant 0 : i32
    %c0_i32_1 = arith.constant 0 : i32
    return %c0_i32, %c0_i32_0 : i32, i32
  }
  func.func @transform_15(%arg0: i32, %arg1: i32) -> (i32, i32) {
    %c0_i32 = arith.constant 0 : i32
    %c0_i32_0 = arith.constant 0 : i32
    return %arg0, %c0_i32 : i32, i32
  }
}

</mosaic_0001>

<llo_original>
// kernel: tpu_custom_call.1
$region0: #{tpu_custom_call.1}
  #allocation0 [shape = 'u32[]', space=smem, size = 0x4, offset = 0x4, fixed_abs, tag = 'smem constant byte address 0x4 - core index']
  #allocation1 [shape = 'u32[72,128]{1,0:T(1,128)}', space=vmem, size = 0x9000, scoped, tag = 'internal scratch']
  #allocation2 [shape = 'f32[8,32]{1,0:T(8,128)}', space=vmem, size = 0x1000, scoped, tag = 'scratch operand']
  %s0 = inlined_call_operand.vmem [shape: f32[8,256], index: 0, kind: input, shape index: {}]
  %s1 = inlined_call_operand.vmem [shape: f32[8,4], index: 1, kind: input, shape index: {}]
  %s2 = inlined_call_operand.vmem [shape: f32[256,32], index: 2, kind: input, shape index: {}]
  %s3 = inlined_call_operand.vmem [shape: f32[1,32], index: 3, kind: input, shape index: {}]
  %s4 = inlined_call_operand.vmem [shape: f32[1,32], index: 4, kind: input, shape index: {}]
  %s5 = inlined_call_operand.vmem [shape: f32[1,32], index: 5, kind: input, shape index: {}]
  %s6 = inlined_call_operand.vmem [shape: f32[32,64], index: 6, kind: input, shape index: {}]
  %s7 = inlined_call_operand.vmem [shape: f32[4,64], index: 7, kind: input, shape index: {}]
  %s8 = inlined_call_operand.vmem [shape: f32[1,64], index: 8, kind: input, shape index: {}]
  %s9 = inlined_call_operand.vmem [shape: f32[32,32], index: 9, kind: input, shape index: {}]
  %s10 = inlined_call_operand.vmem [shape: f32[1,32], index: 10, kind: input, shape index: {}]
  %s11 = inlined_call_operand.vmem [shape: f32[32,32], index: 11, kind: input, shape index: {}]
  %s12 = inlined_call_operand.vmem [shape: f32[1,32], index: 12, kind: input, shape index: {}]
  %s13 = inlined_call_operand.vmem [shape: f32[2,32], index: 13, kind: input, shape index: {}]
  %s14 = inlined_call_operand.vmem [shape: f32[1,2], index: 14, kind: input, shape index: {}]
  %s15 = inlined_call_operand.vmem [shape: f32[8,2], index: 15, kind: output, shape index: {}]
  %s16 = sld [smem:[#allocation0]]
  $region78: #{tpu_custom_call.1} parent=0
    _
  %s18 = ssub.s32 1, %s16
  %s19 = scalar_select 0, %s18, %s16
  // Predicated region
  $region2: #{tpu_custom_call.1} parent=0 // pred_check
    _
  $region3: #{tpu_custom_call.1} parent=0 // pred_check_branch
    %21 = sbr.rel (0) target = $region5
  $region4: #{tpu_custom_call.1} parent=0 // pred_region
    _
  $region5: #{tpu_custom_call.1} parent=0 // pred_fallthru
    _
  // Predicated region
  $region6: #{tpu_custom_call.1} parent=0 // pred_check
    _
  $region7: #{tpu_custom_call.1} parent=0 // pred_check_branch
    %23 = sbr.rel (0) target = $region9
  $region8: #{tpu_custom_call.1} parent=0 // pred_region
    _
  $region9: #{tpu_custom_call.1} parent=0 // pred_fallthru
    _
  // Predicated region
  $region10: #{tpu_custom_call.1} parent=0 // pred_check
    _
  $region11: #{tpu_custom_call.1} parent=0 // pred_check_branch
    %25 = sbr.rel (0) target = $region13
  $region12: #{tpu_custom_call.1} parent=0 // pred_region
    _
  $region13: #{tpu_custom_call.1} parent=0 // pred_fallthru
    _
  // Predicated region
  $region14: #{tpu_custom_call.1} parent=0 // pred_check
    _
  $region15: #{tpu_custom_call.1} parent=0 // pred_check_branch
    %27 = sbr.rel (0) target = $region17
  $region16: #{tpu_custom_call.1} parent=0 // pred_region
    _
  $region17: #{tpu_custom_call.1} parent=0 // pred_fallthru
    _
  // Predicated region
  $region18: #{tpu_custom_call.1} parent=0 // pred_check
    _
  $region19: #{tpu_custom_call.1} parent=0 // pred_check_branch
    %29 = sbr.rel (0) target = $region21
  $region20: #{tpu_custom_call.1} parent=0 // pred_region
    _
  $region21: #{tpu_custom_call.1} parent=0 // pred_fallthru
    _
  // Predicated region
  $region22: #{tpu_custom_call.1} parent=0 // pred_check
    _
  $region23: #{tpu_custom_call.1} parent=0 // pred_check_branch
    %31 = sbr.rel (0) target = $region25
  $region24: #{tpu_custom_call.1} parent=0 // pred_region
    _
  $region25: #{tpu_custom_call.1} parent=0 // pred_fallthru
    _
  // Predicated region
  $region26: #{tpu_custom_call.1} parent=0 // pred_check
    _
  $region27: #{tpu_custom_call.1} parent=0 // pred_check_branch
    %33 = sbr.rel (0) target = $region29
  $region28: #{tpu_custom_call.1} parent=0 // pred_region
    _
  $region29: #{tpu_custom_call.1} parent=0 // pred_fallthru
    _
  // Predicated region
  $region30: #{tpu_custom_call.1} parent=0 // pred_check
    _
  $region31: #{tpu_custom_call.1} parent=0 // pred_check_branch
    %35 = sbr.rel (0) target = $region33
  $region32: #{tpu_custom_call.1} parent=0 // pred_region
    _
  $region33: #{tpu_custom_call.1} parent=0 // pred_fallthru
    _
  // Predicated region
  $region34: #{tpu_custom_call.1} parent=0 // pred_check
    _
  $region35: #{tpu_custom_call.1} parent=0 // pred_check_branch
    %37 = sbr.rel (0) target = $region37
  $region36: #{tpu_custom_call.1} parent=0 // pred_region
    _
  $region37: #{tpu_custom_call.1} parent=0 // pred_fallthru
    _
  // Predicated region
  $region38: #{tpu_custom_call.1} parent=0 // pred_check
    _
  $region39: #{tpu_custom_call.1} parent=0 // pred_check_branch
    %39 = sbr.rel (0) target = $region41
  $region40: #{tpu_custom_call.1} parent=0 // pred_region
    _
  $region41: #{tpu_custom_call.1} parent=0 // pred_fallthru
    _
  // Predicated region
  $region42: #{tpu_custom_call.1} parent=0 // pred_check
    _
  $region43: #{tpu_custom_call.1} parent=0 // pred_check_branch
    %41 = sbr.rel (0) target = $region45
  $region44: #{tpu_custom_call.1} parent=0 // pred_region
    _
  $region45: #{tpu_custom_call.1} parent=0 // pred_fallthru
    _
  // Predicated region
  $region46: #{tpu_custom_call.1} parent=0 // pred_check
    _
  $region47: #{tpu_custom_call.1} parent=0 // pred_check_branch
    %43 = sbr.rel (0) target = $region49
  $region48: #{tpu_custom_call.1} parent=0 // pred_region
    _
  $region49: #{tpu_custom_call.1} parent=0 // pred_fallthru
    _
  // Predicated region
  $region50: #{tpu_custom_call.1} parent=0 // pred_check
    _
  $region51: #{tpu_custom_call.1} parent=0 // pred_check_branch
    %45 = sbr.rel (0) target = $region53
  $region52: #{tpu_custom_call.1} parent=0 // pred_region
    _
  $region53: #{tpu_custom_call.1} parent=0 // pred_fallthru
    _
  // Predicated region
  $region54: #{tpu_custom_call.1} parent=0 // pred_check
    _
  $region55: #{tpu_custom_call.1} parent=0 // pred_check_branch
    %47 = sbr.rel (0) target = $region57
  $region56: #{tpu_custom_call.1} parent=0 // pred_region
    _
  $region57: #{tpu_custom_call.1} parent=0 // pred_fallthru
    _
  // Predicated region
  $region58: #{tpu_custom_call.1} parent=0 // pred_check
    _
  $region59: #{tpu_custom_call.1} parent=0 // pred_check_branch
    %49 = sbr.rel (0) target = $region61
  $region60: #{tpu_custom_call.1} parent=0 // pred_region
    _
  $region61: #{tpu_custom_call.1} parent=0 // pred_fallthru
    _
  %p50 = scmp.eq.s32.totalorder 0, 0
  // Predicated region
  $region62: #{tpu_custom_call.1} parent=0 // pred_check
    %p51 = pneg %p50
  $region63: #{tpu_custom_call.1} parent=0 // pred_check_branch
    %53 = sbr.rel (%p51) target = $region65
  $region64: #{tpu_custom_call.1} parent=0 // pred_region
    %vm54 = vcmask 261120
    %55 = vst.msk [vmem:[#allocation2] sm:$0xff] %vm54, 0.0
  $region65: #{tpu_custom_call.1} parent=0 // pred_fallthru
    _
  %v56 = vld [vmem:[#allocation2] sm:$0xff]
  %v57 = vld [vmem:[%s0] sm:$0xff]
  %v58 = vld [vmem:[%s0 + $0x8] sm:$0xff]
  %v59 = vld [vmem:[%s2] sm:$0xff]
  %v60 = vld [vmem:[%s2 + $0x8] sm:$0xff]
  %v61 = vld [vmem:[%s2 + $0x10] sm:$0xff]
  %v62 = vld [vmem:[%s2 + $0x18] sm:$0xff]
  %v63 = vld [vmem:[%s2 + $0x20] sm:$0xff]
  %v64 = vld [vmem:[%s2 + $0x28] sm:$0xff]
  %v65 = vld [vmem:[%s2 + $0x30] sm:$0xff]
  %v66 = vld [vmem:[%s2 + $0x38] sm:$0xff]
  %v67 = vld [vmem:[%s2 + $0x40] sm:$0xff]
  %v68 = vld [vmem:[%s2 + $0x48] sm:$0xff]
  %v69 = vld [vmem:[%s2 + $0x50] sm:$0xff]
  %v70 = vld [vmem:[%s2 + $0x58] sm:$0xff]
  %v71 = vld [vmem:[%s2 + $0x60] sm:$0xff]
  %v72 = vld [vmem:[%s2 + $0x68] sm:$0xff]
  %v73 = vld [vmem:[%s2 + $0x70] sm:$0xff]
  %v74 = vld [vmem:[%s2 + $0x78] sm:$0xff]
  %v75 = vld [vmem:[%s2 + $0x80] sm:$0xff]
  %v76 = vld [vmem:[%s2 + $0x88] sm:$0xff]
  %v77 = vld [vmem:[%s2 + $0x90] sm:$0xff]
  %v78 = vld [vmem:[%s2 + $0x98] sm:$0xff]
  %v79 = vld [vmem:[%s2 + $0xa0] sm:$0xff]
  %v80 = vld [vmem:[%s2 + $0xa8] sm:$0xff]
  %v81 = vld [vmem:[%s2 + $0xb0] sm:$0xff]
  %v82 = vld [vmem:[%s2 + $0xb8] sm:$0xff]
  %v83 = vld [vmem:[%s2 + $0xc0] sm:$0xff]
  %v84 = vld [vmem:[%s2 + $0xc8] sm:$0xff]
  %v85 = vld [vmem:[%s2 + $0xd0] sm:$0xff]
  %v86 = vld [vmem:[%s2 + $0xd8] sm:$0xff]
  %v87 = vld [vmem:[%s2 + $0xe0] sm:$0xff]
  %v88 = vld [vmem:[%s2 + $0xe8] sm:$0xff]
  %v89 = vld [vmem:[%s2 + $0xf0] sm:$0xff]
  %v90 = vld [vmem:[%s2 + $0xf8] sm:$0xff]
  %91 = vmatpush.msra.mxu0 %v74
  %92 = vmatpush.msra.mxu0 %v73
  %93 = vmatpush.msra.mxu0 %v72
  %94 = vmatpush.msra.mxu0 %v71
  %95 = vmatpush.msra.mxu0 %v70
  %96 = vmatpush.msra.mxu0 %v69
  %97 = vmatpush.msra.mxu0 %v68
  %98 = vmatpush.msra.mxu0 %v67
  %99 = vmatpush.msra.mxu0 %v66
  %100 = vmatpush.msra.mxu0 %v65
  %101 = vmatpush.msra.mxu0 %v64
  %102 = vmatpush.msra.mxu0 %v63
  %103 = vmatpush.msra.mxu0 %v62
  %104 = vmatpush.msra.mxu0 %v61
  %105 = vmatpush.msra.mxu0 %v60
  %106 = vmatpush.msra.mxu0 %v59
  %107 = vmatmul.f32.gmra.mxu0 %v57
  %v108 = vpop.f32.mrf.mxu0
  %v109 = vadd.f32 0.0, %v108
  %110 = vdwg.mxu0
  %111 = vmatpush.msra.mxu0 %v90
  %112 = vmatpush.msra.mxu0 %v89
  %113 = vmatpush.msra.mxu0 %v88
  %114 = vmatpush.msra.mxu0 %v87
  %115 = vmatpush.msra.mxu0 %v86
  %116 = vmatpush.msra.mxu0 %v85
  %117 = vmatpush.msra.mxu0 %v84
  %118 = vmatpush.msra.mxu0 %v83
  %119 = vmatpush.msra.mxu0 %v82
  %120 = vmatpush.msra.mxu0 %v81
  %121 = vmatpush.msra.mxu0 %v80
  %122 = vmatpush.msra.mxu0 %v79
  %123 = vmatpush.msra.mxu0 %v78
  %124 = vmatpush.msra.mxu0 %v77
  %125 = vmatpush.msra.mxu0 %v76
  %126 = vmatpush.msra.mxu0 %v75
  %127 = vmatmul.f32.gmra.mxu0 %v58
  %v128 = vpop.f32.mrf.mxu0
  %v129 = vadd.f32 %v109, %v128
  %130 = vdwg.mxu0
  %v131 = vadd.f32 %v56, %v129
  %vm132 = vcmask 261120
  %133 = vst.msk [vmem:[#allocation2] sm:$0xff] %vm132, %v131
  // Predicated region
  $region66: #{tpu_custom_call.1} parent=0 // pred_check
    %p134 = pneg %p50
  $region67: #{tpu_custom_call.1} parent=0 // pred_check_branch
    %136 = sbr.rel (%p134) target = $region69
  $region68: #{tpu_custom_call.1} parent=0 // pred_region
    %v137 = vld [vmem:[#allocation2] sm:$0xff]
    %v138 = vld [vmem:[%s3] sm:$0x1]
    %v140 = vperm.slane %v138, 0
    %v142 = vadd.f32 %v137, %v140
    %v143 = vsel %vm132, %v142, 0.0
    %144 = vadd.xlane.f32.xlu0 %v143
    %v145 = vpop.xlane.xlu0 %144
    %v146 = vrcp.pop 32.0
    %v147 = vmul.f32 32.0, %v146
    %v148 = vsub.f32 1.0, %v147
    %v149 = vmul.f32 %v146, %v148
    %v150 = vadd.f32 %v146, %v149
    %vm151 = vweird.f32 %v146
    %v152 = vsel %vm151, %v146, %v150
    %v153 = vmul.f32 %v145, %v152
    %v154 = vsub.f32 %v142, %v153
    %v155 = vmul.f32 %v154, %v154
    %v156 = vsel %vm132, %v155, 0.0
    %157 = vadd.xlane.f32.xlu0 %v156
    %v158 = vpop.xlane.xlu0 %157
    %v159 = vmul.f32 %v158, %v152
    %v160 = vadd.f32 %v159, 1e-05
    %v161 = vrsqrt.pop %v160
    %v162 = vmul.f32 %v161, %v160
    %v163 = vmul.f32 %v162, %v161
    %v164 = vmul.f32 0.5, %v163
    %v165 = vsub.f32 1.5, %v164
    %v166 = vmul.f32 %v161, %v165
    %vm167 = vweird.f32 %v160
    %vm168 = vweird.f32 %v161
    %vm169 = vmor %vm167, %vm168
    %v170 = vsel %vm169, %v161, %v166
    %v171 = vmul.f32 %v154, %v170
    %v172 = vld [vmem:[%s4] sm:$0x1]
    %v174 = vperm.slane %v172, 0
    %v176 = vmul.f32 %v171, %v174
    %v177 = vld [vmem:[%s5] sm:$0x1]
    %v179 = vperm.slane %v177, 0
    %v181 = vadd.f32 %v176, %v179
    %v182 = vtanh.pop %v181
    %v183 = vld [vmem:[%s6] sm:$0xff]
    %v184 = vld [vmem:[%s6 + $0x8] sm:$0xff]
    %v185 = vld [vmem:[%s6 + $0x10] sm:$0xff]
    %v186 = vld [vmem:[%s6 + $0x18] sm:$0xff]
    %v187 = vld [vmem:[%s1] sm:$0xff]
    %v188 = vld [vmem:[%s7] sm:$0xf]
    %vm189 = vcmask 31744
    %v191 = vsel %vm189, %v187, 0
    %vm193 = vcmask 1043456
    %v195 = vsel %vm193, %v188, 0
    %197 = vmatpush.msra.mxu0 0.0
    %198 = vmatpush.msra.mxu0 0.0
    %199 = vmatpush.msra.mxu0 0.0
    %200 = vmatpush.msra.mxu0 0.0
    %201 = vmatpush.msra.mxu0 0.0
    %202 = vmatpush.msra.mxu0 0.0
    %203 = vmatpush.msra.mxu0 0.0
    %204 = vmatpush.msra.mxu0 0.0
    %205 = vmatpush.msra.mxu0 0.0
    %206 = vmatpush.msra.mxu0 0.0
    %207 = vmatpush.msra.mxu0 0.0
    %208 = vmatpush.msra.mxu0 0.0
    %209 = vmatpush.msra.mxu0 0.0
    %210 = vmatpush.msra.mxu0 0.0
    %211 = vmatpush.msra.mxu0 0.0
    %212 = vmatpush.msra.mxu0 %v195
    %213 = vmatmul.f32.gmra.mxu0 %v191
    %v214 = vpop.f32.mrf.mxu0
    %v215 = vadd.f32 0.0, %v214
    %216 = vdwg.mxu0
    %v218 = vsel %vm132, %v182, 0
    %220 = vmatpush.msra.mxu0 0.0
    %221 = vmatpush.msra.mxu0 0.0
    %222 = vmatpush.msra.mxu0 0.0
    %223 = vmatpush.msra.mxu0 0.0
    %224 = vmatpush.msra.mxu0 0.0
    %225 = vmatpush.msra.mxu0 0.0
    %226 = vmatpush.msra.mxu0 0.0
    %227 = vmatpush.msra.mxu0 0.0
    %228 = vmatpush.msra.mxu0 0.0
    %229 = vmatpush.msra.mxu0 0.0
    %230 = vmatpush.msra.mxu0 0.0
    %231 = vmatpush.msra.mxu0 0.0
    %232 = vmatpush.msra.mxu0 %v186
    %233 = vmatpush.msra.mxu0 %v185
    %234 = vmatpush.msra.mxu0 %v184
    %235 = vmatpush.msra.mxu0 %v183
    %236 = vmatmul.f32.gmra.mxu0 %v218
    %v237 = vpop.f32.mrf.mxu0
    %v238 = vadd.f32 %v215, %v237
    %239 = vdwg.mxu0
    %v240 = vld [vmem:[%s8] sm:$0x1]
    %v242 = vperm.slane %v240, 0
    %v244 = vadd.f32 %v238, %v242
    %v245 = vmax.f32 %v244, 0.0
    %v246 = vld [vmem:[%s9] sm:$0xff]
    %v247 = vld [vmem:[%s9 + $0x8] sm:$0xff]
    %v248 = vld [vmem:[%s9 + $0x10] sm:$0xff]
    %v249 = vld [vmem:[%s9 + $0x18] sm:$0xff]
    %v250 = vld [vmem:[%s10] sm:$0x1]
    %v252 = vperm.slane %v250, 0
    %v255 = vsel %vm132, %v245, 0
    %257 = vmatpush.msra.mxu0 0.0
    %258 = vmatpush.msra.mxu0 0.0
    %259 = vmatpush.msra.mxu0 0.0
    %260 = vmatpush.msra.mxu0 0.0
    %261 = vmatpush.msra.mxu0 0.0
    %262 = vmatpush.msra.mxu0 0.0
    %263 = vmatpush.msra.mxu0 0.0
    %264 = vmatpush.msra.mxu0 0.0
    %265 = vmatpush.msra.mxu0 0.0
    %266 = vmatpush.msra.mxu0 0.0
    %267 = vmatpush.msra.mxu0 0.0
    %268 = vmatpush.msra.mxu0 0.0
    %269 = vmatpush.msra.mxu0 %v249
    %270 = vmatpush.msra.mxu0 %v248
    %271 = vmatpush.msra.mxu0 %v247
    %272 = vmatpush.msra.mxu0 %v246
    %273 = vmatmul.f32.gmra.mxu0 %v255
    %v274 = vpop.f32.mrf.mxu0
    %v275 = vadd.f32 %v252, %v274
    %276 = vdwg.mxu0
    %v277 = vmax.f32 %v275, 0.0
    %v278 = vld [vmem:[%s11] sm:$0xff]
    %v279 = vld [vmem:[%s11 + $0x8] sm:$0xff]
    %v280 = vld [vmem:[%s11 + $0x10] sm:$0xff]
    %v281 = vld [vmem:[%s11 + $0x18] sm:$0xff]
    %v282 = vld [vmem:[%s12] sm:$0x1]
    %v284 = vperm.slane %v282, 0
    %286 = vrot.lane.b32.xlu0 %v245, 96
    %v287 = vpop.permute.xlu0 %286
    %v288 = vsel %vm132, %v287, 0
    %290 = vmatpush.msra.mxu0 0.0
    %291 = vmatpush.msra.mxu0 0.0
    %292 = vmatpush.msra.mxu0 0.0
    %293 = vmatpush.msra.mxu0 0.0
    %294 = vmatpush.msra.mxu0 0.0
    %295 = vmatpush.msra.mxu0 0.0
    %296 = vmatpush.msra.mxu0 0.0
    %297 = vmatpush.msra.mxu0 0.0
    %298 = vmatpush.msra.mxu0 0.0
    %299 = vmatpush.msra.mxu0 0.0
    %300 = vmatpush.msra.mxu0 0.0
    %301 = vmatpush.msra.mxu0 0.0
    %302 = vmatpush.msra.mxu0 %v281
    %303 = vmatpush.msra.mxu0 %v280
    %304 = vmatpush.msra.mxu0 %v279
    %305 = vmatpush.msra.mxu0 %v278
    %306 = vmatmul.f32.gmra.mxu0 %v288
    %v307 = vpop.f32.mrf.mxu0
    %v308 = vadd.f32 %v284, %v307
    %309 = vdwg.mxu0
    %v310 = vmax.f32 %v308, 0.0
    %v311 = vld [vmem:[%s13] sm:$0x3]
    %v312 = vperm.slane %v311, 0
    %v313 = vmul.f32 %v277, %v312
    %v314 = vsel %vm132, %v313, 0.0
    %315 = vadd.xlane.f32.xlu0 %v314
    %v316 = vpop.xlane.xlu0 %315
    %v317 = vperm.slane %v311, 1
    %v318 = vmul.f32 %v310, %v317
    %v319 = vsel %vm132, %v318, 0.0
    %320 = vadd.xlane.f32.xlu0 %v319
    %v321 = vpop.xlane.xlu0 %320
    %vm322 = vcmask 7168
    %v323 = vsel %vm322, %v316, %v321
    %v324 = vld [vmem:[%s14] sm:$0x1]
    %v326 = vperm.slane %v324, 0
    %v328 = vadd.f32 %v323, %v326
    %vm329 = vcmask 15360
    %330 = vst.msk [vmem:[%s15] sm:$0xff] %vm329, %v328
  $region69: #{tpu_custom_call.1} parent=0 // pred_fallthru
    _
  // Predicated region
  $region70: #{tpu_custom_call.1} parent=0 // pred_check
    _
  $region71: #{tpu_custom_call.1} parent=0 // pred_check_branch
    %332 = sbr.rel (0) target = $region73
  $region72: #{tpu_custom_call.1} parent=0 // pred_region
    _
  $region73: #{tpu_custom_call.1} parent=0 // pred_fallthru
    _
  // Predicated region
  $region74: #{tpu_custom_call.1} parent=0 // pred_check
    _
  $region75: #{tpu_custom_call.1} parent=0 // pred_check_branch
    %334 = sbr.rel (0) target = $region77
  $region76: #{tpu_custom_call.1} parent=0 // pred_region
    _
  $region77: #{tpu_custom_call.1} parent=0 // pred_fallthru
    _

</llo_original>
